<compile_context>
chip_gen: v6e
topology: v6e:2x2x1
jax: 0.10.0
libtpu: 0.0.40
codegen_flags: <defaults>
</compile_context>

<pallas_src>
import jax
import jax.numpy as jnp
from jax.experimental import pallas as pl
from jax.experimental.pallas import tpu as pltpu

# Synthetic stand-ins for the module-level config in the original repo.
AUGMENT_METHOD = "concat"
FEATURE_AUGMENT = ["node_degree", "node_clustering_coefficient"]
FEATURE_AUGMENT_DIMS = [8, 16]

_LANE = 128
_MAX_TILE_ROWS = 8192
# >= 2x TensorCores on every generation (v7x has 2 TCs) and enough steps for
# the BlockSpec pipeline to overlap input DMA / store / output writeback.
_MIN_GRID_STEPS = 8


def _concat_kernel(nf_ref, *rest_refs):
    """Concatenate node_feature and augment features along the last axis.

    Builds the full [tile_rows, dim_out] tile in vregs (XLU lane packing,
    cheap relative to the store slot) and issues a single store — keeps the
    scarce vst slot (1/bundle on v5e) from becoming the binding unit.
    """
    *aug_refs, out_ref = rest_refs
    parts = [nf_ref[...]] + [r[...] for r in aug_refs]
    out_ref[...] = jnp.concatenate(parts, axis=-1)


def _round_up(x, m):
    return ((x + m - 1) // m) * m


def _sublane_granule(dtype):
    """Row granule: 8 for f32, 16 for bf16, 32 for int8/fp8 (sublane packing)."""
    return max(8, 32 // jnp.dtype(dtype).itemsize)


def _padded_bytes_per_row(dims, dtype):
    """Lane-padded bytes per row across all listed feature widths."""
    itemsize = jnp.dtype(dtype).itemsize
    return sum(_round_up(int(d), _LANE) for d in dims) * itemsize


def _vmem_budget_bytes():
    """Per-generation budget for the double-buffered working set."""
    try:
        cap = int(pltpu.get_tpu_info().vmem_capacity_bytes)
    except Exception:
        cap = 64 * 1024 * 1024  # conservative: v7x per-TC VMEM
    # Stay well under a quarter of physical VMEM (headroom for the other TC
    # on v7x and compiler scratch).  16 MiB of working set is already far
    # past the HBM-roofline knee on all three generations for a pure copy.
    return min(cap // 4, 16 * 1024 * 1024)


def _pick_tile_rows(n_rows, dim_in, aug_dims, dtype):
    """Largest row tile fitting the padded, double-buffered VMEM budget,
    further capped so the grid has multiple steps (pipelining + megacore)."""
    dim_out = dim_in + sum(aug_dims)
    granule = _sublane_granule(dtype)
    # Inputs + output, each lane-padded to 128 and double-buffered.
    bytes_per_row = _padded_bytes_per_row([dim_in, *aug_dims, dim_out], dtype) * 2
    budget = _vmem_budget_bytes()

    tile = max(granule, budget // max(1, bytes_per_row))
    tile = min(int(tile), _MAX_TILE_ROWS)
    # Keep the grid multi-step so DMA/compute/writeback overlap and both TCs
    # get work on v7x (per-step overhead ~0.35 us is noise at these tiles).
    tile = min(tile, max(granule, pl.cdiv(n_rows, _MIN_GRID_STEPS)))
    tile = max(granule, (tile // granule) * granule)
    # Don't allocate beyond the (granule-rounded) data for tiny inputs.
    tile = min(tile, _round_up(n_rows, granule))
    return tile, bytes_per_row


def preprocess_concat(node_feature, aug_features, *, tile_rows=None):
    """Pallas equivalent of Preprocess.forward (concat path).

    node_feature: [N, dim_in]
    aug_features: list of [N, aug_dim_k] arrays (same dtype as node_feature)
    returns:      [N, dim_in + sum(aug_dims)]
    """
    N, dim_in = node_feature.shape
    dtype = node_feature.dtype
    for a in aug_features:
        # Mixed dtypes would promote inside the kernel and then silently
        # downcast to out_shape's dtype — require matching dtypes instead.
        assert a.dtype == dtype, (
            f"augment feature dtype {a.dtype} != node_feature dtype {dtype}")
        assert a.shape[0] == N, "augment feature row count mismatch"

    aug_dims = [int(a.shape[-1]) for a in aug_features]
    dim_out = dim_in + sum(aug_dims)

    picked_rows, bytes_per_row = _pick_tile_rows(N, dim_in, aug_dims, dtype)
    if tile_rows is None:
        tile_rows = picked_rows

    grid = (pl.cdiv(N, tile_rows),)

    def row_map(i):
        return (i, 0)

    in_specs = [pl.BlockSpec((tile_rows, dim_in), row_map)]
    for d in aug_dims:
        in_specs.append(pl.BlockSpec((tile_rows, d), row_map))
    out_spec = pl.BlockSpec((tile_rows, dim_out), row_map)

    # Explicit VMEM limit tied to the actual lane-padded, double-buffered
    # footprint (plus 2x headroom), so behavior does not depend on the
    # per-generation scoped defaults (16 MiB v5e vs 32 MiB v6e/v7x).
    vmem_limit = int(min(max(tile_rows * bytes_per_row * 2, 8 * 1024 * 1024),
                         64 * 1024 * 1024))

    itemsize = jnp.dtype(dtype).itemsize
    bytes_accessed = N * (dim_in + sum(aug_dims) + dim_out) * itemsize
    cost = pl.CostEstimate(flops=0, transcendentals=0,
                           bytes_accessed=bytes_accessed)

    return pl.pallas_call(
        _concat_kernel,
        out_shape=jax.ShapeDtypeStruct((N, dim_out), dtype),
        grid=grid,
        in_specs=in_specs,
        out_specs=out_spec,
        compiler_params=pltpu.CompilerParams(
            dimension_semantics=("parallel",),
            vmem_limit_bytes=vmem_limit),
        cost_estimate=cost,
    )(node_feature, *aug_features)


class PreprocessPallas:
    """Mirror of the PyTorch `Preprocess` module (AUGMENT_METHOD='concat')."""

    def __init__(self, dim_in):
        self.dim_in = dim_in
        # 'add' path would build per-key Linear(aug_dim, dim_in) modules;
        # not exercised for AUGMENT_METHOD == 'concat'.
        # TODO(synk): implement 'add' path (Linear projections) if needed.

    @property
    def dim_out(self):
        return self.dim_in + sum(FEATURE_AUGMENT_DIMS)

    def __call__(self, batch):
        feature_list = [batch["node_feature"]]
        for key in FEATURE_AUGMENT:
            feature_list.append(batch[key])
        batch = dict(batch)
        batch["node_feature"] = preprocess_concat(
            feature_list[0], feature_list[1:])
        return batch


if __name__ == "__main__":
    key = jax.random.PRNGKey(0)
    N = 128        # number of graph nodes (small test shape)
    DIM_IN = 32    # input node-feature dim

    k0, k1, k2 = jax.random.split(key, 3)
    batch = {
        "node_feature": jax.random.normal(k0, (N, DIM_IN), dtype=jnp.float32),
        "node_degree": jax.random.normal(
            k1, (N, FEATURE_AUGMENT_DIMS[0]), dtype=jnp.float32),
        "node_clustering_coefficient": jax.random.normal(
            k2, (N, FEATURE_AUGMENT_DIMS[1]), dtype=jnp.float32),
    }

    model = PreprocessPallas(DIM_IN)
    out_batch = model(batch)
    out = jax.block_until_ready(out_batch["node_feature"])

    # Reference check (plain JAX concat, matches torch.cat(dim=-1)).
    ref = jnp.concatenate(
        [batch["node_feature"]] + [batch[k] for k in FEATURE_AUGMENT], axis=-1)
    assert out.shape == (N, model.dim_out), out.shape
    assert jnp.allclose(out, ref), "mismatch vs reference concat"

    print("KERNEL_OK")
</pallas_src>

<mosaic_0001>
module attributes {stable_mosaic.version = 11 : i64} {
  func.func @_concat_kernel(%arg0: i32, %arg1: memref<16x32xf32, #tpu.memory_space<vmem>>, %arg2: memref<16x8xf32, #tpu.memory_space<vmem>>, %arg3: memref<16x16xf32, #tpu.memory_space<vmem>>, %arg4: memref<16x56xf32, #tpu.memory_space<vmem>>) attributes {dimension_semantics = [#tpu.dimension_semantics<parallel>], iteration_bounds = array<i64: 8>, scalar_prefetch = 0 : i64, scratch_operands = 0 : i64, tpu.core_type = #tpu.core_type<tc>, window_params = [{transform_indices = @transform_0, window_bounds = array<i64: 16, 32>}, {transform_indices = @transform_1, window_bounds = array<i64: 16, 8>}, {transform_indices = @transform_2, window_bounds = array<i64: 16, 16>}, {transform_indices = @transform_3, window_bounds = array<i64: 16, 56>}]} {
    %c0 = arith.constant 0 : index
    %c0_0 = arith.constant 0 : index
    %0 = vector.load %arg1[%c0, %c0_0] : memref<16x32xf32, #tpu.memory_space<vmem>>, vector<16x32xf32>
    %c0_1 = arith.constant 0 : index
    %c0_2 = arith.constant 0 : index
    %1 = vector.load %arg2[%c0_1, %c0_2] : memref<16x8xf32, #tpu.memory_space<vmem>>, vector<16x8xf32>
    %c0_3 = arith.constant 0 : index
    %c0_4 = arith.constant 0 : index
    %2 = vector.load %arg3[%c0_3, %c0_4] : memref<16x16xf32, #tpu.memory_space<vmem>>, vector<16x16xf32>
    %3 = tpu.concatenate %0, %1, %2 in 1 : vector<16x32xf32>, vector<16x8xf32>, vector<16x16xf32> -> vector<16x56xf32>
    %c0_5 = arith.constant 0 : index
    %c0_6 = arith.constant 0 : index
    %4 = vector.load %arg4[%c0_5, %c0_6] : memref<16x56xf32, #tpu.memory_space<vmem>>, vector<16x56xf32>
    tpu.vector_store %arg4[%c0_5, %c0_6], %3 {strides = array<i32>} : memref<16x56xf32, #tpu.memory_space<vmem>>, vector<16x56xf32>,
    return
  }
  func.func @transform_0(%arg0: i32) -> (i32, i32) {
    %c0_i32 = arith.constant 0 : i32
    %c0_i32_0 = arith.constant 0 : i32
    return %arg0, %c0_i32 : i32, i32
  }
  func.func @transform_1(%arg0: i32) -> (i32, i32) {
    %c0_i32 = arith.constant 0 : i32
    %c0_i32_0 = arith.constant 0 : i32
    return %arg0, %c0_i32 : i32, i32
  }
  func.func @transform_2(%arg0: i32) -> (i32, i32) {
    %c0_i32 = arith.constant 0 : i32
    %c0_i32_0 = arith.constant 0 : i32
    return %arg0, %c0_i32 : i32, i32
  }
  func.func @transform_3(%arg0: i32) -> (i32, i32) {
    %c0_i32 = arith.constant 0 : i32
    %c0_i32_0 = arith.constant 0 : i32
    return %arg0, %c0_i32 : i32, i32
  }
}

</mosaic_0001>

<llo_original>
// kernel: tpu_custom_call.1
$region0: #{tpu_custom_call.1}
  #allocation0 [shape = 'u32[]', space=smem, size = 0x4, offset = 0x4, fixed_abs, tag = 'smem constant byte address 0x4 - core index']
  #allocation1 [shape = 'u32[144,128]{1,0:T(1,128)}', space=vmem, size = 0x12000, scoped, tag = 'internal scratch']
  %s0 = inlined_call_operand.vmem [shape: f32[128,32], index: 0, kind: input, shape index: {}]
  %s1 = inlined_call_operand.vmem [shape: f32[128,8], index: 1, kind: input, shape index: {}]
  %s2 = inlined_call_operand.vmem [shape: f32[128,16], index: 2, kind: input, shape index: {}]
  %s3 = inlined_call_operand.vmem [shape: f32[128,56], index: 3, kind: output, shape index: {}]
  %s4 = sld [smem:[#allocation0]]
  $region45: #{tpu_custom_call.1} parent=0
    _
  %s6 = ssub.s32 1, %s4
  %s7 = scalar_select 0, %s6, %s4
  loop: start=0, step=1, limit=10
  $region2: #{tpu_custom_call.1} parent=0 // loop_pre_header
    _
  $region3: #{tpu_custom_call.1} parent=0 // loop_header
    %s9 = sphi 0, %s13
    %p10 = scmp.ge.s32.totalorder %s9, 10
    %s19 = sphi 0, %s21
    %s22 = sphi 0, %s19
    %s23 = sphi 0, %s22
    %s39 = sphi 0, %s23
    %s45 = sphi 0, %s47
    %s48 = sphi 0, %s45
    %s49 = sphi 0, %s48
    %s65 = sphi 0, %s49
    %s71 = sphi 0, %s73
    %s74 = sphi 0, %s71
    %s75 = sphi 0, %s74
    %s91 = sphi 0, %s75
    %s97 = sphi 0, %s99
    %s100 = sphi 0, %s97
    %s101 = sphi 0, %s100
    %s117 = sphi 0, %s101
  $region4: #{tpu_custom_call.1} parent=0 // loop_header_branch
    %12 = sbr.rel (%p10) target = $region8
  $region5: #{tpu_custom_call.1} parent=0 // loop_body
    %s14 = ssub.s32 %s9, 1
    %s15 = ssub.s32 %s9, 2
    %s16 = sadd.s32 %s9, 1
    %s17 = ssub.s32 %s9, %s16
    %p18 = scmp.eq.s32.totalorder %s17, 0
    %s20 = sadd.s32 %s19, 1
    %s21 = scalar_select %p18, %s19, %s20
    %p24 = pneg %p18
    %p25 = scmp.eq.s32.totalorder %s9, 7
    %p26 = por %p24, %p25
    %p27 = scmp.ne.s32.totalorder %s19, %s22
    %p28 = scmp.eq.s32.totalorder %s9, 0
    %p29 = por %p27, %p28
    %p30 = scmp.ne.s32.totalorder %s19, %s22
    %p31 = scmp.eq.s32.totalorder %s14, 7
    %p32 = por %p30, %p31
    %p33 = scmp.ne.s32.totalorder %s22, %s23
    %p34 = scmp.eq.s32.totalorder %s14, 0
    %p35 = por %p33, %p34
    %p36 = scmp.ne.s32.totalorder %s22, %s23
    %p37 = scmp.eq.s32.totalorder %s15, 7
    %p38 = por %p36, %p37
    %p40 = scmp.ne.s32.totalorder %s23, %s39
    %p41 = scmp.eq.s32.totalorder %s15, 0
    %p42 = por %p40, %p41
    %s43 = ssub.s32 %s9, %s16
    %p44 = scmp.eq.s32.totalorder %s43, 0
    %s46 = sadd.s32 %s45, 1
    %s47 = scalar_select %p44, %s45, %s46
    %p50 = pneg %p44
    %p51 = scmp.eq.s32.totalorder %s9, 7
    %p52 = por %p50, %p51
    %p53 = scmp.ne.s32.totalorder %s45, %s48
    %p54 = scmp.eq.s32.totalorder %s9, 0
    %p55 = por %p53, %p54
    %p56 = scmp.ne.s32.totalorder %s45, %s48
    %p57 = scmp.eq.s32.totalorder %s14, 7
    %p58 = por %p56, %p57
    %p59 = scmp.ne.s32.totalorder %s48, %s49
    %p60 = scmp.eq.s32.totalorder %s14, 0
    %p61 = por %p59, %p60
    %p62 = scmp.ne.s32.totalorder %s48, %s49
    %p63 = scmp.eq.s32.totalorder %s15, 7
    %p64 = por %p62, %p63
    %p66 = scmp.ne.s32.totalorder %s49, %s65
    %p67 = scmp.eq.s32.totalorder %s15, 0
    %p68 = por %p66, %p67
    %s69 = ssub.s32 %s9, %s16
    %p70 = scmp.eq.s32.totalorder %s69, 0
    %s72 = sadd.s32 %s71, 1
    %s73 = scalar_select %p70, %s71, %s72
    %p76 = pneg %p70
    %p77 = scmp.eq.s32.totalorder %s9, 7
    %p78 = por %p76, %p77
    %p79 = scmp.ne.s32.totalorder %s71, %s74
    %p80 = scmp.eq.s32.totalorder %s9, 0
    %p81 = por %p79, %p80
    %p82 = scmp.ne.s32.totalorder %s71, %s74
    %p83 = scmp.eq.s32.totalorder %s14, 7
    %p84 = por %p82, %p83
    %p85 = scmp.ne.s32.totalorder %s74, %s75
    %p86 = scmp.eq.s32.totalorder %s14, 0
    %p87 = por %p85, %p86
    %p88 = scmp.ne.s32.totalorder %s74, %s75
    %p89 = scmp.eq.s32.totalorder %s15, 7
    %p90 = por %p88, %p89
    %p92 = scmp.ne.s32.totalorder %s75, %s91
    %p93 = scmp.eq.s32.totalorder %s15, 0
    %p94 = por %p92, %p93
    %s95 = ssub.s32 %s9, %s16
    %p96 = scmp.eq.s32.totalorder %s95, 0
    %s98 = sadd.s32 %s97, 1
    %s99 = scalar_select %p96, %s97, %s98
    %p102 = pneg %p96
    %p103 = scmp.eq.s32.totalorder %s9, 7
    %p104 = por %p102, %p103
    %p105 = scmp.ne.s32.totalorder %s97, %s100
    %p106 = scmp.eq.s32.totalorder %s9, 0
    %p107 = por %p105, %p106
    %p108 = scmp.ne.s32.totalorder %s97, %s100
    %p109 = scmp.eq.s32.totalorder %s14, 7
    %p110 = por %p108, %p109
    %p111 = scmp.ne.s32.totalorder %s100, %s101
    %p112 = scmp.eq.s32.totalorder %s14, 0
    %p113 = por %p111, %p112
    %p114 = scmp.ne.s32.totalorder %s100, %s101
    %p115 = scmp.eq.s32.totalorder %s15, 7
    %p116 = por %p114, %p115
    %p118 = scmp.ne.s32.totalorder %s101, %s117
    %p119 = scmp.eq.s32.totalorder %s15, 0
    %p120 = por %p118, %p119
    %p121 = scmp.le.s32.totalorder 1, %s9
    %p122 = scmp.lt.s32.totalorder %s9, 9
    %p123 = pnand %p121, %p122
    %p124 = pneg %p123
    // Predicated region
    $region9: #{tpu_custom_call.1} parent=5 // pred_check
      _
    $region10: #{tpu_custom_call.1} parent=5 // pred_check_branch
      %126 = sbr.rel (%p123) target = $region12
    $region11: #{tpu_custom_call.1} parent=5 // pred_region
      %s127 = ssub.s32 %s9, 1
    $region12: #{tpu_custom_call.1} parent=5 // pred_fallthru
      _
    %p128 = scmp.lt.s32.totalorder %s9, 8
    // Predicated region
    $region13: #{tpu_custom_call.1} parent=5 // pred_check
      %p129 = pneg %p128
    $region14: #{tpu_custom_call.1} parent=5 // pred_check_branch
      %131 = sbr.rel (%p129) target = $region16
    $region15: #{tpu_custom_call.1} parent=5 // pred_region
      // Predicated region
      $region17: #{tpu_custom_call.1} parent=15 // pred_check
        %p132 = pneg %p29
      $region18: #{tpu_custom_call.1} parent=15 // pred_check_branch
        %134 = sbr.rel (%p132) target = $region20
      $region19: #{tpu_custom_call.1} parent=15 // pred_region
        %s135 = smul.u32 2, %s9
        %p136 = scmp.lt.s32.totalorder %s135, 15
        %s137 = scalar_select %p136, %s135, 15
        %s138 = smul.addr %s137, 8
        %s139 = scalar_lea.vmem %s0, %s138
        %s140 = smul.u32 2, %s9
      $region20: #{tpu_custom_call.1} parent=15 // pred_fallthru
        _
      // Predicated region
      $region21: #{tpu_custom_call.1} parent=15 // pred_check
        %p141 = pneg %p55
      $region22: #{tpu_custom_call.1} parent=15 // pred_check_branch
        %143 = sbr.rel (%p141) target = $region24
      $region23: #{tpu_custom_call.1} parent=15 // pred_region
        %s144 = smul.u32 2, %s9
        %p145 = scmp.lt.s32.totalorder %s144, 15
        %s146 = scalar_select %p145, %s144, 15
        %s147 = smul.addr %s146, 8
        %s148 = scalar_lea.vmem %s1, %s147
        %s149 = smul.u32 2, %s9
      $region24: #{tpu_custom_call.1} parent=15 // pred_fallthru
        _
      // Predicated region
      $region25: #{tpu_custom_call.1} parent=15 // pred_check
        %p150 = pneg %p81
      $region26: #{tpu_custom_call.1} parent=15 // pred_check_branch
        %152 = sbr.rel (%p150) target = $region28
      $region27: #{tpu_custom_call.1} parent=15 // pred_region
        %s153 = smul.u32 2, %s9
        %p154 = scmp.lt.s32.totalorder %s153, 15
        %s155 = scalar_select %p154, %s153, 15
        %s156 = smul.addr %s155, 8
        %s157 = scalar_lea.vmem %s2, %s156
        %s158 = smul.u32 2, %s9
      $region28: #{tpu_custom_call.1} parent=15 // pred_fallthru
        _
    $region16: #{tpu_custom_call.1} parent=5 // pred_fallthru
      _
    %p159 = scmp.le.s32.totalorder 1, %s9
    %p160 = scmp.lt.s32.totalorder %s9, 9
    %p161 = pnand %p159, %p160
    %p162 = pneg %p161
    // Predicated region
    $region29: #{tpu_custom_call.1} parent=5 // pred_check
      _
    $region30: #{tpu_custom_call.1} parent=5 // pred_check_branch
      %164 = sbr.rel (%p161) target = $region32
    $region31: #{tpu_custom_call.1} parent=5 // pred_region
      %s165 = ssub.s32 %s9, 1
      %s166 = smul.u32 2, %s14
      %p167 = scmp.lt.s32.totalorder %s166, 15
      %s168 = scalar_select %p167, %s166, 15
      %s169 = smul.addr %s168, 8
      %s170 = scalar_lea.vmem %s0, %s169
      %p171 = pneg %p35
      %p172 = pneg %p32
      %s173 = smul.u32 2, %s14
      %p174 = scmp.lt.s32.totalorder %s173, 15
      %s175 = scalar_select %p174, %s173, 15
      %s176 = smul.addr %s175, 8
      %s177 = scalar_lea.vmem %s1, %s176
      %p178 = pneg %p61
      %p179 = pneg %p58
      %s180 = smul.u32 2, %s14
      %p181 = scmp.lt.s32.totalorder %s180, 15
      %s182 = scalar_select %p181, %s180, 15
      %s183 = smul.addr %s182, 8
      %s184 = scalar_lea.vmem %s2, %s183
      %p185 = pneg %p87
      %p186 = pneg %p84
      %p187 = pneg %p113
      %p188 = pneg %p110
      %s189 = smul.u32 2, %s14
      %p190 = scmp.lt.s32.totalorder %s189, 15
      %s191 = scalar_select %p190, %s189, 15
      %s192 = smul.addr %s191, 8
      %s193 = scalar_lea.vmem %s3, %s192
      %s194 = smul.u32 2, %s14
      %p195 = scmp.lt.s32.totalorder %s194, 15
      %s196 = scalar_select %p195, %s194, 15
      %s197 = smul.addr %s196, 8
      %s198 = scalar_lea.vmem %s0, %s197
      %s199 = smul.u32 2, %s14
      %s200 = smul.u32 2, %s14
      %p201 = scmp.lt.s32.totalorder %s200, 15
      %s202 = scalar_select %p201, %s200, 15
      %s203 = smul.addr %s202, 8
      %s204 = scalar_lea.vmem %s1, %s203
      %s205 = smul.u32 2, %s14
      %s206 = smul.u32 2, %s14
      %p207 = scmp.lt.s32.totalorder %s206, 15
      %s208 = scalar_select %p207, %s206, 15
      %s209 = smul.addr %s208, 8
      %s210 = scalar_lea.vmem %s2, %s209
      %s211 = smul.u32 2, %s14
      %s212 = smul.u32 2, %s14
      %p213 = scmp.lt.s32.totalorder %s212, 15
      %s214 = scalar_select %p213, %s212, 15
      %s215 = smul.addr %s214, 8
      %s216 = scalar_lea.vmem %s3, %s215
      %s217 = smul.u32 2, %s14
      %v218 = vld [vmem:[%s198] sm:$0xff]
      %v219 = vld [vmem:[%s198 + $0x8] sm:$0xff]
      %v220 = vld [vmem:[%s204] sm:$0xff]
      %v221 = vld [vmem:[%s204 + $0x8] sm:$0xff]
      %v222 = vld [vmem:[%s210] sm:$0xff]
      %v223 = vld [vmem:[%s210 + $0x8] sm:$0xff]
      %226 = vrot.lane.b32.xlu0 %v220, 32
      %v227 = vpop.permute.xlu0 %226
      %228 = vrot.lane.b32.xlu0 %v221, 32
      %v229 = vpop.permute.xlu0 %228
      %234 = vrot.lane.b32.xlu0 %v222, 40
      %v235 = vpop.permute.xlu0 %234
      %236 = vrot.lane.b32.xlu0 %v223, 40
      %v237 = vpop.permute.xlu0 %236
      %vm240 = vcmask 261120
      %v241 = vsel %vm240, %v218, %v227
      %v242 = vsel %vm240, %v219, %v229
      %vm243 = vcmask 326656
      %v244 = vsel %vm243, %v241, %v235
      %v245 = vsel %vm243, %v242, %v237
      %vm246 = vcmask 457728
      %247 = vst.msk [vmem:[%s216] sm:$0xff] %vm246, %v244
      %248 = vst.msk [vmem:[%s216 + $0x8] sm:$0xff] %vm246, %v245
      %s249 = smul.u32 2, %s14
      %p250 = scmp.lt.s32.totalorder %s249, 15
      %s251 = scalar_select %p250, %s249, 15
      %s252 = smul.addr %s251, 8
      %s253 = scalar_lea.vmem %s3, %s252
      // Predicated region
      $region33: #{tpu_custom_call.1} parent=31 // pred_check
        %p254 = pneg %p110
      $region34: #{tpu_custom_call.1} parent=31 // pred_check_branch
        %256 = sbr.rel (%p254) target = $region36
      $region35: #{tpu_custom_call.1} parent=31 // pred_region
        %s257 = smul.u32 2, %s14
      $region36: #{tpu_custom_call.1} parent=31 // pred_fallthru
        _
    $region32: #{tpu_custom_call.1} parent=5 // pred_fallthru
      _
    %p258 = scmp.le.s32.totalorder 2, %s9
    // Predicated region
    $region37: #{tpu_custom_call.1} parent=5 // pred_check
      %p259 = pneg %p258
    $region38: #{tpu_custom_call.1} parent=5 // pred_check_branch
      %261 = sbr.rel (%p259) target = $region40
    $region39: #{tpu_custom_call.1} parent=5 // pred_region
      %s262 = ssub.s32 %s9, 2
      // Predicated region
      $region41: #{tpu_custom_call.1} parent=39 // pred_check
        %p263 = pneg %p116
      $region42: #{tpu_custom_call.1} parent=39 // pred_check_branch
        %265 = sbr.rel (%p263) target = $region44
      $region43: #{tpu_custom_call.1} parent=39 // pred_region
        %s266 = smul.u32 2, %s15
        %p267 = scmp.lt.s32.totalorder %s266, 15
        %s268 = scalar_select %p267, %s266, 15
        %s269 = smul.addr %s268, 8
        %s270 = scalar_lea.vmem %s3, %s269
      $region44: #{tpu_custom_call.1} parent=39 // pred_fallthru
        _
    $region40: #{tpu_custom_call.1} parent=5 // pred_fallthru
      _
  $region6: #{tpu_custom_call.1} parent=0 // loop_footer
    %s13 = sadd.s32 1, %s9
  $region7: #{tpu_custom_call.1} parent=0 // loop_footer_branch
    %8 = sbr.rel target = $region3
  $region8: #{tpu_custom_call.1} parent=0 // loop_exit
    _

</llo_original>
